<compile_context>
chip_gen: v5e
topology: v5e:2x2
jax: 0.10.0
libtpu: 0.0.40
codegen_flags: <defaults>
</compile_context>

<pallas_src>
import jax
import jax.numpy as jnp
from jax import lax
from jax.experimental import pallas as pl
from jax.experimental.pallas import tpu as pltpu

_VMEM = pl.BlockSpec(memory_space=pltpu.MemorySpace.VMEM)
_LANE = 128  # TPU lane width; all kernel outputs are padded to this


# ----------------------------------------------------------------------------
# Fused kernel: folded encoder -> per-block BatchNorm1d -> PReLU -> output Linear
# ----------------------------------------------------------------------------
def _make_fused_kernel(n_models, n_extra):
    """Build a kernel for `n_models` sub-model inputs and `n_extra` additional
    feature blocks (extra_features / batch_labels)."""

    def kernel(*refs):
        i = 0
        xs = refs[i:i + n_models]; i += n_models                  # [B, d_in_k]
        extras = refs[i:i + n_extra]; i += n_extra                # [B, d_e]
        wfs = refs[i:i + n_models]; i += n_models                 # [d_in_k, LANE]
        bf = refs[i]; i += 1                                      # [1, LANE]
        g_lat, b_lat = refs[i], refs[i + 1]; i += 2               # [1, LANE]
        extra_gb = [(refs[i + 2 * j], refs[i + 2 * j + 1]) for j in range(n_extra)]
        i += 2 * n_extra                                          # [1, d_e] each
        alpha = refs[i]; i += 1                                   # [1, 1]
        wo_lat = refs[i]; i += 1                                  # [LANE, LANE]
        wo_extra = refs[i:i + n_extra]; i += n_extra              # [d_e, LANE]
        bo = refs[i]; i += 1                                      # [1, LANE]
        out_ref, lat_ref = refs[i], refs[i + 1]                   # [B, LANE] each

        # Folded encoder: latents = sum_i x_i @ Wf_i + bf   (lane-padded to 128).
        lat = jnp.zeros(lat_ref.shape, jnp.float32) + bf[...]
        for x, wf in zip(xs, wfs):
            lat = lat + jnp.dot(x[...], wf[...], preferred_element_type=jnp.float32)
        lat_ref[...] = lat  # full-width, unmasked store

        a = alpha[...]  # PReLU shared alpha, broadcasts

        def bn_prelu(v, g, b):
            # BatchNorm1d training-mode (biased var, eps=1e-5), one-pass variance.
            mean = jnp.mean(v, axis=0, keepdims=True)
            var = jnp.mean(v * v, axis=0, keepdims=True) - mean * mean
            y = (v - mean) * lax.rsqrt(var + 1e-5) * g + b
            return jnp.where(y >= 0.0, y, a * y)

        # Output Linear split per block (no concat): out = sum_b act_b @ Wo_b + bo.
        out = bo[...] + jnp.dot(bn_prelu(lat, g_lat[...], b_lat[...]),
                                wo_lat[...], preferred_element_type=jnp.float32)
        for e, (g, b), wo in zip(extras, extra_gb, wo_extra):
            out = out + jnp.dot(bn_prelu(e[...], g[...], b[...]),
                                wo[...], preferred_element_type=jnp.float32)
        out_ref[...] = out  # full-width, unmasked store

    return kernel


def _pad_cols(a, width, value=0.0):
    return jnp.pad(a, ((0, 0), (0, width - a.shape[1])), constant_values=value)


# ----------------------------------------------------------------------------
# ModelEnsemble in JAX (sub-models are simple Linear classifiers)
# ----------------------------------------------------------------------------
class ModelEnsembleJAX:
    def __init__(self, model_dims, input_dim, latent_dim, n_output_nodes,
                 additional_dims=(), key=jax.random.PRNGKey(0)):
        # model_dims: list of (sub_model_in_dim, sub_model_out_dim)
        assert sum(d_out for _, d_out in model_dims) == input_dim
        assert latent_dim <= _LANE and n_output_nodes <= _LANE
        self.latent_dim = latent_dim
        self.n_output_nodes = n_output_nodes
        self.additional_dims = tuple(additional_dims)
        self.model_base_type = "clf"

        keys = jax.random.split(key, 2 * len(model_dims) + 4)

        # --- raw parameters (mirror the PyTorch module structure) -------------
        self.sub_models = []
        for i, (d_in, d_out) in enumerate(model_dims):
            w = 0.1 * jax.random.normal(keys[2 * i], (d_in, d_out), jnp.float32)
            b = 0.1 * jax.random.normal(keys[2 * i + 1], (1, d_out), jnp.float32)
            self.sub_models.append((w, b))

        k0, k1, k2, k3 = keys[-4:]
        exp_dim = latent_dim + sum(self.additional_dims)
        self.raw = {
            "enc_w": 0.1 * jax.random.normal(k0, (input_dim, latent_dim), jnp.float32),
            "enc_b": 0.1 * jax.random.normal(k1, (1, latent_dim), jnp.float32),
            "bn_gamma": jnp.ones((1, exp_dim), jnp.float32),
            "bn_beta": jnp.zeros((1, exp_dim), jnp.float32),
            "prelu_alpha": jnp.full((1, 1), 0.25, jnp.float32),
            "out_w": 0.1 * jax.random.normal(k2, (exp_dim, n_output_nodes), jnp.float32),
            "out_b": 0.1 * jax.random.normal(k3, (1, n_output_nodes), jnp.float32),
        }

        # --- fold sub-model linears into the encoder (once, on the host) ------
        enc_w, enc_b = self.raw["enc_w"], self.raw["enc_b"]
        self.wf_pad = []
        bf = enc_b
        off = 0
        for (w, b), (_, d_out) in zip(self.sub_models, model_dims):
            we_blk = enc_w[off:off + d_out, :]            # rows of We for this model
            self.wf_pad.append(_pad_cols(w @ we_blk, _LANE))
            bf = bf + b @ we_blk
            off += d_out
        self.bf_pad = _pad_cols(bf, _LANE)

        # --- split + lane-pad BN / PReLU / output-Linear parameters -----------
        g, bt = self.raw["bn_gamma"], self.raw["bn_beta"]
        wo, bo = self.raw["out_w"], self.raw["out_b"]

        # latent block: pad gamma with 1, beta with 0; pad Wo rows & cols with 0
        self.g_lat = _pad_cols(g[:, :latent_dim], _LANE, 1.0)
        self.b_lat = _pad_cols(bt[:, :latent_dim], _LANE, 0.0)
        wo_lat = _pad_cols(wo[:latent_dim, :], _LANE)
        self.wo_lat = jnp.pad(wo_lat, ((0, _LANE - latent_dim), (0, 0)))
        self.bo_pad = _pad_cols(bo, _LANE)
        self.alpha = self.raw["prelu_alpha"]

        # additional blocks (extra_features, batch_labels, ...)
        self.extra_gb = []
        self.wo_extra = []
        r = latent_dim
        for d in self.additional_dims:
            self.extra_gb.append((g[:, r:r + d], bt[:, r:r + d]))
            self.wo_extra.append(_pad_cols(wo[r:r + d, :], _LANE))
            r += d

    def __call__(self, inputs, extra_features=None, batch_labels=None):
        extras = [t for t in (extra_features, batch_labels) if t is not None]
        assert len(extras) == len(self.additional_dims), \
            "additional inputs must match additional_dims"
        for e, d in zip(extras, self.additional_dims):
            assert e.shape[1] == d

        inputs = [x.astype(jnp.float32) for x in inputs]
        extras = [e.astype(jnp.float32) for e in extras]
        n_models, n_extra = len(inputs), len(extras)
        B = inputs[0].shape[0]

        args = list(inputs) + extras + list(self.wf_pad) + \
            [self.bf_pad, self.g_lat, self.b_lat]
        for gb in self.extra_gb:
            args += list(gb)
        args += [self.alpha, self.wo_lat] + list(self.wo_extra) + [self.bo_pad]

        # TODO(synk): for large batches, add a batch grid (BlockSpec tiles) with a
        # two-pass BN (per-tile partial sums -> global stats) and
        # dimension_semantics=("parallel",) so v7x's two TensorCores both run.
        out_pad, lat_pad = pl.pallas_call(
            _make_fused_kernel(n_models, n_extra),
            out_shape=(
                jax.ShapeDtypeStruct((B, _LANE), jnp.float32),
                jax.ShapeDtypeStruct((B, _LANE), jnp.float32),
            ),
            in_specs=[_VMEM] * len(args),
            out_specs=(_VMEM, _VMEM),
        )(*args)

        return {
            "outputs": out_pad[:, :self.n_output_nodes],
            "latents": lat_pad[:, :self.latent_dim],
        }


# ----------------------------------------------------------------------------
# Pure-JAX reference (unfused, matches the PyTorch forward math)
# ----------------------------------------------------------------------------
def _reference_forward(sub_models, raw, inputs, extras):
    outs = [x @ w + b for x, (w, b) in zip(inputs, sub_models)]
    cat = jnp.concatenate(outs, axis=1)
    latents = cat @ raw["enc_w"] + raw["enc_b"]
    exp = latents
    for e in extras:
        exp = jnp.concatenate([exp, e], axis=1)
    mean = jnp.mean(exp, axis=0, keepdims=True)
    var = jnp.mean((exp - mean) ** 2, axis=0, keepdims=True)
    y = (exp - mean) / jnp.sqrt(var + 1e-5) * raw["bn_gamma"] + raw["bn_beta"]
    act = jnp.where(y >= 0, y, raw["prelu_alpha"] * y)
    out = act @ raw["out_w"] + raw["out_b"]
    return out, latents


# ----------------------------------------------------------------------------
if __name__ == "__main__":
    key = jax.random.PRNGKey(0)
    k_in0, k_in1, k_in2, k_ef, k_bl, k_params = jax.random.split(key, 6)

    B = 8
    model_dims = [(16, 8), (16, 12), (16, 12)]   # concat of out dims -> input_dim=32
    input_dim = 32
    latent_dim = 16
    extra_dim = 8
    label_dim = 8
    n_output_nodes = 4

    ensemble = ModelEnsembleJAX(
        model_dims, input_dim, latent_dim, n_output_nodes,
        additional_dims=(extra_dim, label_dim), key=k_params,
    )

    inputs = [
        jax.random.normal(k_in0, (B, 16), jnp.float32),
        jax.random.normal(k_in1, (B, 16), jnp.float32),
        jax.random.normal(k_in2, (B, 16), jnp.float32),
    ]
    extra_features = jax.random.normal(k_ef, (B, extra_dim), jnp.float32)
    batch_labels = jax.random.normal(k_bl, (B, label_dim), jnp.float32)

    out = ensemble(inputs, extra_features=extra_features, batch_labels=batch_labels)
    jax.block_until_ready(out)

    assert out["outputs"].shape == (B, n_output_nodes)
    assert out["latents"].shape == (B, latent_dim)

    ref_out, ref_lat = _reference_forward(
        ensemble.sub_models, ensemble.raw, inputs, [extra_features, batch_labels])
    assert jnp.allclose(out["latents"], ref_lat, rtol=1e-4, atol=1e-4)
    assert jnp.allclose(out["outputs"], ref_out, rtol=1e-4, atol=1e-4)

    print("KERNEL_OK")
</pallas_src>

<mosaic_0001>
module attributes {stable_mosaic.version = 11 : i64} {
  func.func @kernel(%arg0: memref<8x16xf32, #tpu.memory_space<vmem>>, %arg1: memref<8x16xf32, #tpu.memory_space<vmem>>, %arg2: memref<8x16xf32, #tpu.memory_space<vmem>>, %arg3: memref<8x8xf32, #tpu.memory_space<vmem>>, %arg4: memref<8x8xf32, #tpu.memory_space<vmem>>, %arg5: memref<16x128xf32, #tpu.memory_space<vmem>>, %arg6: memref<16x128xf32, #tpu.memory_space<vmem>>, %arg7: memref<16x128xf32, #tpu.memory_space<vmem>>, %arg8: memref<1x128xf32, #tpu.memory_space<vmem>>, %arg9: memref<1x128xf32, #tpu.memory_space<vmem>>, %arg10: memref<1x128xf32, #tpu.memory_space<vmem>>, %arg11: memref<1x8xf32, #tpu.memory_space<vmem>>, %arg12: memref<1x8xf32, #tpu.memory_space<vmem>>, %arg13: memref<1x8xf32, #tpu.memory_space<vmem>>, %arg14: memref<1x8xf32, #tpu.memory_space<vmem>>, %arg15: memref<1x1xf32, #tpu.memory_space<vmem>>, %arg16: memref<128x128xf32, #tpu.memory_space<vmem>>, %arg17: memref<8x128xf32, #tpu.memory_space<vmem>>, %arg18: memref<8x128xf32, #tpu.memory_space<vmem>>, %arg19: memref<1x128xf32, #tpu.memory_space<vmem>>, %arg20: memref<8x128xf32, #tpu.memory_space<vmem>>, %arg21: memref<8x128xf32, #tpu.memory_space<vmem>>) attributes {dimension_semantics = [], scalar_prefetch = 0 : i64, scratch_operands = 0 : i64, tpu.core_type = #tpu.core_type<tc>} {
    %cst = arith.constant 0.000000e+00 : f32
    %0 = vector.broadcast %cst : f32 to vector<8x128xf32>
    %c0 = arith.constant 0 : index
    %c0_0 = arith.constant 0 : index
    %1 = vector.load %arg8[%c0, %c0_0] : memref<1x128xf32, #tpu.memory_space<vmem>>, vector<1x128xf32>
    %2 = vector.broadcast %1 : vector<1x128xf32> to vector<8x128xf32>
    %3 = arith.addf %0, %2 : vector<8x128xf32>
    %c0_1 = arith.constant 0 : index
    %c0_2 = arith.constant 0 : index
    %4 = vector.load %arg0[%c0_1, %c0_2] : memref<8x16xf32, #tpu.memory_space<vmem>>, vector<8x16xf32>
    %c0_3 = arith.constant 0 : index
    %c0_4 = arith.constant 0 : index
    %5 = vector.load %arg5[%c0_3, %c0_4] : memref<16x128xf32, #tpu.memory_space<vmem>>, vector<16x128xf32>
    %cst_5 = arith.constant dense<0.000000e+00> : vector<8x128xf32>
    %6 = tpu.matmul %4, %5, %cst_5 {dimension_numbers = #tpu.dot_dimension_numbers<[1], [0], [0], [1], [0, 0, 1, 1], [], []>} : vector<8x16xf32>, vector<16x128xf32>, vector<8x128xf32> -> vector<8x128xf32>
    %7 = arith.addf %3, %6 : vector<8x128xf32>
    %c0_6 = arith.constant 0 : index
    %c0_7 = arith.constant 0 : index
    %8 = vector.load %arg1[%c0_6, %c0_7] : memref<8x16xf32, #tpu.memory_space<vmem>>, vector<8x16xf32>
    %c0_8 = arith.constant 0 : index
    %c0_9 = arith.constant 0 : index
    %9 = vector.load %arg6[%c0_8, %c0_9] : memref<16x128xf32, #tpu.memory_space<vmem>>, vector<16x128xf32>
    %cst_10 = arith.constant dense<0.000000e+00> : vector<8x128xf32>
    %10 = tpu.matmul %8, %9, %cst_10 {dimension_numbers = #tpu.dot_dimension_numbers<[1], [0], [0], [1], [0, 0, 1, 1], [], []>} : vector<8x16xf32>, vector<16x128xf32>, vector<8x128xf32> -> vector<8x128xf32>
    %11 = arith.addf %7, %10 : vector<8x128xf32>
    %c0_11 = arith.constant 0 : index
    %c0_12 = arith.constant 0 : index
    %12 = vector.load %arg2[%c0_11, %c0_12] : memref<8x16xf32, #tpu.memory_space<vmem>>, vector<8x16xf32>
    %c0_13 = arith.constant 0 : index
    %c0_14 = arith.constant 0 : index
    %13 = vector.load %arg7[%c0_13, %c0_14] : memref<16x128xf32, #tpu.memory_space<vmem>>, vector<16x128xf32>
    %cst_15 = arith.constant dense<0.000000e+00> : vector<8x128xf32>
    %14 = tpu.matmul %12, %13, %cst_15 {dimension_numbers = #tpu.dot_dimension_numbers<[1], [0], [0], [1], [0, 0, 1, 1], [], []>} : vector<8x16xf32>, vector<16x128xf32>, vector<8x128xf32> -> vector<8x128xf32>
    %15 = arith.addf %11, %14 : vector<8x128xf32>
    %c0_16 = arith.constant 0 : index
    %c0_17 = arith.constant 0 : index
    %16 = vector.load %arg21[%c0_16, %c0_17] : memref<8x128xf32, #tpu.memory_space<vmem>>, vector<8x128xf32>
    tpu.vector_store %arg21[%c0_16, %c0_17], %15 {strides = array<i32>} : memref<8x128xf32, #tpu.memory_space<vmem>>, vector<8x128xf32>,
    %c0_18 = arith.constant 0 : index
    %c0_19 = arith.constant 0 : index
    %17 = vector.load %arg15[%c0_18, %c0_19] : memref<1x1xf32, #tpu.memory_space<vmem>>, vector<1x1xf32>
    %c0_20 = arith.constant 0 : index
    %c0_21 = arith.constant 0 : index
    %18 = vector.load %arg19[%c0_20, %c0_21] : memref<1x128xf32, #tpu.memory_space<vmem>>, vector<1x128xf32>
    %c0_22 = arith.constant 0 : index
    %c0_23 = arith.constant 0 : index
    %19 = vector.load %arg9[%c0_22, %c0_23] : memref<1x128xf32, #tpu.memory_space<vmem>>, vector<1x128xf32>
    %c0_24 = arith.constant 0 : index
    %c0_25 = arith.constant 0 : index
    %20 = vector.load %arg10[%c0_24, %c0_25] : memref<1x128xf32, #tpu.memory_space<vmem>>, vector<1x128xf32>
    %cst_26 = arith.constant dense<0.000000e+00> : vector<128xf32>
    %21 = vector.multi_reduction <add>, %15, %cst_26 [0] : vector<8x128xf32> to vector<128xf32>
    %22 = vector.shape_cast %21 : vector<128xf32> to vector<1x128xf32>
    %cst_27 = arith.constant 8.000000e+00 : f32
    %23 = vector.broadcast %cst_27 : f32 to vector<1x128xf32>
    %24 = arith.divf %22, %23 : vector<1x128xf32>
    %25 = arith.mulf %15, %15 : vector<8x128xf32>
    %cst_28 = arith.constant dense<0.000000e+00> : vector<128xf32>
    %26 = vector.multi_reduction <add>, %25, %cst_28 [0] : vector<8x128xf32> to vector<128xf32>
    %27 = vector.shape_cast %26 : vector<128xf32> to vector<1x128xf32>
    %cst_29 = arith.constant 8.000000e+00 : f32
    %28 = vector.broadcast %cst_29 : f32 to vector<1x128xf32>
    %29 = arith.divf %27, %28 : vector<1x128xf32>
    %30 = arith.mulf %24, %24 : vector<1x128xf32>
    %31 = arith.subf %29, %30 : vector<1x128xf32>
    %32 = vector.broadcast %24 : vector<1x128xf32> to vector<8x128xf32>
    %33 = arith.subf %15, %32 : vector<8x128xf32>
    %cst_30 = arith.constant 9.99999974E-6 : f32
    %34 = vector.broadcast %cst_30 : f32 to vector<1x128xf32>
    %35 = arith.addf %31, %34 : vector<1x128xf32>
    %36 = math.rsqrt %35 : vector<1x128xf32>
    %37 = vector.broadcast %36 : vector<1x128xf32> to vector<8x128xf32>
    %38 = arith.mulf %33, %37 : vector<8x128xf32>
    %39 = vector.broadcast %19 : vector<1x128xf32> to vector<8x128xf32>
    %40 = arith.mulf %38, %39 : vector<8x128xf32>
    %41 = vector.broadcast %20 : vector<1x128xf32> to vector<8x128xf32>
    %42 = arith.addf %40, %41 : vector<8x128xf32>
    %cst_31 = arith.constant 0.000000e+00 : f32
    %43 = vector.broadcast %cst_31 : f32 to vector<8x128xf32>
    %44 = arith.cmpf oge, %42, %43 : vector<8x128xf32>
    %45 = vector.broadcast %17 : vector<1x1xf32> to vector<8x128xf32>
    %46 = arith.mulf %45, %42 : vector<8x128xf32>
    %47 = arith.select %44, %42, %46 : vector<8x128xi1>, vector<8x128xf32>
    %c0_32 = arith.constant 0 : index
    %c0_33 = arith.constant 0 : index
    %48 = vector.load %arg16[%c0_32, %c0_33] : memref<128x128xf32, #tpu.memory_space<vmem>>, vector<128x128xf32>
    %cst_34 = arith.constant dense<0.000000e+00> : vector<8x128xf32>
    %49 = tpu.matmul %47, %48, %cst_34 {dimension_numbers = #tpu.dot_dimension_numbers<[1], [0], [0], [1], [0, 0, 1, 1], [], []>} : vector<8x128xf32>, vector<128x128xf32>, vector<8x128xf32> -> vector<8x128xf32>
    %50 = vector.broadcast %18 : vector<1x128xf32> to vector<8x128xf32>
    %51 = arith.addf %50, %49 : vector<8x128xf32>
    %c0_35 = arith.constant 0 : index
    %c0_36 = arith.constant 0 : index
    %52 = vector.load %arg3[%c0_35, %c0_36] : memref<8x8xf32, #tpu.memory_space<vmem>>, vector<8x8xf32>
    %c0_37 = arith.constant 0 : index
    %c0_38 = arith.constant 0 : index
    %53 = vector.load %arg11[%c0_37, %c0_38] : memref<1x8xf32, #tpu.memory_space<vmem>>, vector<1x8xf32>
    %c0_39 = arith.constant 0 : index
    %c0_40 = arith.constant 0 : index
    %54 = vector.load %arg12[%c0_39, %c0_40] : memref<1x8xf32, #tpu.memory_space<vmem>>, vector<1x8xf32>
    %cst_41 = arith.constant dense<0.000000e+00> : vector<8xf32>
    %55 = vector.multi_reduction <add>, %52, %cst_41 [0] : vector<8x8xf32> to vector<8xf32>
    %56 = vector.shape_cast %55 : vector<8xf32> to vector<1x8xf32>
    %cst_42 = arith.constant 8.000000e+00 : f32
    %57 = vector.broadcast %cst_42 : f32 to vector<1x8xf32>
    %58 = arith.divf %56, %57 : vector<1x8xf32>
    %59 = arith.mulf %52, %52 : vector<8x8xf32>
    %cst_43 = arith.constant dense<0.000000e+00> : vector<8xf32>
    %60 = vector.multi_reduction <add>, %59, %cst_43 [0] : vector<8x8xf32> to vector<8xf32>
    %61 = vector.shape_cast %60 : vector<8xf32> to vector<1x8xf32>
    %cst_44 = arith.constant 8.000000e+00 : f32
    %62 = vector.broadcast %cst_44 : f32 to vector<1x8xf32>
    %63 = arith.divf %61, %62 : vector<1x8xf32>
    %64 = arith.mulf %58, %58 : vector<1x8xf32>
    %65 = arith.subf %63, %64 : vector<1x8xf32>
    %66 = vector.broadcast %58 : vector<1x8xf32> to vector<8x8xf32>
    %67 = arith.subf %52, %66 : vector<8x8xf32>
    %cst_45 = arith.constant 9.99999974E-6 : f32
    %68 = vector.broadcast %cst_45 : f32 to vector<1x8xf32>
    %69 = arith.addf %65, %68 : vector<1x8xf32>
    %70 = math.rsqrt %69 : vector<1x8xf32>
    %71 = vector.broadcast %70 : vector<1x8xf32> to vector<8x8xf32>
    %72 = arith.mulf %67, %71 : vector<8x8xf32>
    %73 = vector.broadcast %53 : vector<1x8xf32> to vector<8x8xf32>
    %74 = arith.mulf %72, %73 : vector<8x8xf32>
    %75 = vector.broadcast %54 : vector<1x8xf32> to vector<8x8xf32>
    %76 = arith.addf %74, %75 : vector<8x8xf32>
    %cst_46 = arith.constant 0.000000e+00 : f32
    %77 = vector.broadcast %cst_46 : f32 to vector<8x8xf32>
    %78 = arith.cmpf oge, %76, %77 : vector<8x8xf32>
    %79 = vector.broadcast %17 : vector<1x1xf32> to vector<8x8xf32>
    %80 = arith.mulf %79, %76 : vector<8x8xf32>
    %81 = arith.select %78, %76, %80 : vector<8x8xi1>, vector<8x8xf32>
    %c0_47 = arith.constant 0 : index
    %c0_48 = arith.constant 0 : index
    %82 = vector.load %arg17[%c0_47, %c0_48] : memref<8x128xf32, #tpu.memory_space<vmem>>, vector<8x128xf32>
    %cst_49 = arith.constant dense<0.000000e+00> : vector<8x128xf32>
    %83 = tpu.matmul %81, %82, %cst_49 {dimension_numbers = #tpu.dot_dimension_numbers<[1], [0], [0], [1], [0, 0, 1, 1], [], []>} : vector<8x8xf32>, vector<8x128xf32>, vector<8x128xf32> -> vector<8x128xf32>
    %84 = arith.addf %51, %83 : vector<8x128xf32>
    %c0_50 = arith.constant 0 : index
    %c0_51 = arith.constant 0 : index
    %85 = vector.load %arg4[%c0_50, %c0_51] : memref<8x8xf32, #tpu.memory_space<vmem>>, vector<8x8xf32>
    %c0_52 = arith.constant 0 : index
    %c0_53 = arith.constant 0 : index
    %86 = vector.load %arg13[%c0_52, %c0_53] : memref<1x8xf32, #tpu.memory_space<vmem>>, vector<1x8xf32>
    %c0_54 = arith.constant 0 : index
    %c0_55 = arith.constant 0 : index
    %87 = vector.load %arg14[%c0_54, %c0_55] : memref<1x8xf32, #tpu.memory_space<vmem>>, vector<1x8xf32>
    %cst_56 = arith.constant dense<0.000000e+00> : vector<8xf32>
    %88 = vector.multi_reduction <add>, %85, %cst_56 [0] : vector<8x8xf32> to vector<8xf32>
    %89 = vector.shape_cast %88 : vector<8xf32> to vector<1x8xf32>
    %cst_57 = arith.constant 8.000000e+00 : f32
    %90 = vector.broadcast %cst_57 : f32 to vector<1x8xf32>
    %91 = arith.divf %89, %90 : vector<1x8xf32>
    %92 = arith.mulf %85, %85 : vector<8x8xf32>
    %cst_58 = arith.constant dense<0.000000e+00> : vector<8xf32>
    %93 = vector.multi_reduction <add>, %92, %cst_58 [0] : vector<8x8xf32> to vector<8xf32>
    %94 = vector.shape_cast %93 : vector<8xf32> to vector<1x8xf32>
    %cst_59 = arith.constant 8.000000e+00 : f32
    %95 = vector.broadcast %cst_59 : f32 to vector<1x8xf32>
    %96 = arith.divf %94, %95 : vector<1x8xf32>
    %97 = arith.mulf %91, %91 : vector<1x8xf32>
    %98 = arith.subf %96, %97 : vector<1x8xf32>
    %99 = vector.broadcast %91 : vector<1x8xf32> to vector<8x8xf32>
    %100 = arith.subf %85, %99 : vector<8x8xf32>
    %cst_60 = arith.constant 9.99999974E-6 : f32
    %101 = vector.broadcast %cst_60 : f32 to vector<1x8xf32>
    %102 = arith.addf %98, %101 : vector<1x8xf32>
    %103 = math.rsqrt %102 : vector<1x8xf32>
    %104 = vector.broadcast %103 : vector<1x8xf32> to vector<8x8xf32>
    %105 = arith.mulf %100, %104 : vector<8x8xf32>
    %106 = vector.broadcast %86 : vector<1x8xf32> to vector<8x8xf32>
    %107 = arith.mulf %105, %106 : vector<8x8xf32>
    %108 = vector.broadcast %87 : vector<1x8xf32> to vector<8x8xf32>
    %109 = arith.addf %107, %108 : vector<8x8xf32>
    %cst_61 = arith.constant 0.000000e+00 : f32
    %110 = vector.broadcast %cst_61 : f32 to vector<8x8xf32>
    %111 = arith.cmpf oge, %109, %110 : vector<8x8xf32>
    %112 = vector.broadcast %17 : vector<1x1xf32> to vector<8x8xf32>
    %113 = arith.mulf %112, %109 : vector<8x8xf32>
    %114 = arith.select %111, %109, %113 : vector<8x8xi1>, vector<8x8xf32>
    %c0_62 = arith.constant 0 : index
    %c0_63 = arith.constant 0 : index
    %115 = vector.load %arg18[%c0_62, %c0_63] : memref<8x128xf32, #tpu.memory_space<vmem>>, vector<8x128xf32>
    %cst_64 = arith.constant dense<0.000000e+00> : vector<8x128xf32>
    %116 = tpu.matmul %114, %115, %cst_64 {dimension_numbers = #tpu.dot_dimension_numbers<[1], [0], [0], [1], [0, 0, 1, 1], [], []>} : vector<8x8xf32>, vector<8x128xf32>, vector<8x128xf32> -> vector<8x128xf32>
    %117 = arith.addf %84, %116 : vector<8x128xf32>
    %c0_65 = arith.constant 0 : index
    %c0_66 = arith.constant 0 : index
    %118 = vector.load %arg20[%c0_65, %c0_66] : memref<8x128xf32, #tpu.memory_space<vmem>>, vector<8x128xf32>
    tpu.vector_store %arg20[%c0_65, %c0_66], %117 {strides = array<i32>} : memref<8x128xf32, #tpu.memory_space<vmem>>, vector<8x128xf32>,
    return
  }
}

</mosaic_0001>

<llo_original>
// kernel: tpu_custom_call.1
$region0: #{tpu_custom_call.1}
  #allocation0 [shape = 'u32[]', space=smem, size = 0x4, offset = 0x4, fixed_abs, tag = 'smem constant byte address 0x4 - core index']
  #allocation1 [shape = 'u32[72,128]{1,0:T(1,128)}', space=vmem, size = 0x9000, scoped, tag = 'internal scratch']
  #allocation2 [shape = 'f32[1,1]{1,0:T(1,128)S(1)}', space=vmem, size = 0x200, scoped, tag = 'scoped memory for tpu_custom_call.1']
  %s0 = inlined_call_operand.hbm [shape: f32[8,16], index: 0, kind: input, shape index: {}]
  %s1 = inlined_call_operand.hbm [shape: f32[8,16], index: 1, kind: input, shape index: {}]
  %s2 = inlined_call_operand.hbm [shape: f32[8,16], index: 2, kind: input, shape index: {}]
  %s3 = inlined_call_operand.hbm [shape: f32[8,8], index: 3, kind: input, shape index: {}]
  %s4 = inlined_call_operand.hbm [shape: f32[8,8], index: 4, kind: input, shape index: {}]
  %s5 = inlined_call_operand.hbm [shape: f32[16,128], index: 5, kind: input, shape index: {}]
  %s6 = inlined_call_operand.hbm [shape: f32[16,128], index: 6, kind: input, shape index: {}]
  %s7 = inlined_call_operand.hbm [shape: f32[16,128], index: 7, kind: input, shape index: {}]
  %s8 = inlined_call_operand.hbm [shape: f32[1,128], index: 8, kind: input, shape index: {}]
  %s9 = inlined_call_operand.hbm [shape: f32[1,128], index: 9, kind: input, shape index: {}]
  %s10 = inlined_call_operand.hbm [shape: f32[1,128], index: 10, kind: input, shape index: {}]
  %s11 = inlined_call_operand.hbm [shape: f32[1,8], index: 11, kind: input, shape index: {}]
  %s12 = inlined_call_operand.hbm [shape: f32[1,8], index: 12, kind: input, shape index: {}]
  %s13 = inlined_call_operand.hbm [shape: f32[1,8], index: 13, kind: input, shape index: {}]
  %s14 = inlined_call_operand.hbm [shape: f32[1,8], index: 14, kind: input, shape index: {}]
  %s15 = inlined_call_operand.<no memory space> [shape: f32[1,1], index: 15, kind: input, shape index: {}]
  %s16 = inlined_call_operand.hbm [shape: f32[128,128], index: 16, kind: input, shape index: {}]
  %s17 = inlined_call_operand.vmem [shape: f32[8,128], index: 17, kind: input, shape index: {}]
  %s18 = inlined_call_operand.vmem [shape: f32[8,128], index: 18, kind: input, shape index: {}]
  %s19 = inlined_call_operand.vmem [shape: f32[1,128], index: 19, kind: input, shape index: {}]
  %s20 = inlined_call_operand.hbm [shape: f32[8,128], index: 20, kind: output, shape index: {0}]
  %s21 = inlined_call_operand.hbm [shape: f32[8,128], index: 21, kind: output, shape index: {1}]
  %22 = xla_tuple %s20, %s21
  %s23 = sld [smem:[#allocation0]]
  $region162: #{tpu_custom_call.1} parent=0
    _
  %s25 = ssub.s32 1, %s23
  %s26 = scalar_select 0, %s25, %s23
  %v27 = vstv %s15
  %28 = vst [vmem:[#allocation2] sm:$0x1] %v27
  $region1: #{tpu_custom_call.1} parent=0
    #allocation3 [shape = 'u8[4096]{0}', space=vmem, size = 0x1000, scoped, tag = 'input window, operand 0, single buffered']
    #allocation4 [shape = 's32[1]{0}', space=sflag, size = 0x4, scoped, tag = 'scoped memory for tpu_custom_call.1']
    #allocation5 [shape = 's32[1]{0}', space=sflag, size = 0x4, scoped, tag = 'scoped memory for tpu_custom_call.1']
    #allocation6 [shape = 'u8[4096]{0}', space=vmem, size = 0x1000, scoped, tag = 'input window, operand 1, single buffered']
    #allocation7 [shape = 's32[1]{0}', space=sflag, size = 0x4, scoped, tag = 'scoped memory for tpu_custom_call.1']
    #allocation8 [shape = 'u8[4096]{0}', space=vmem, size = 0x1000, scoped, tag = 'input window, operand 2, single buffered']
    #allocation9 [shape = 'u8[4096]{0}', space=vmem, size = 0x1000, scoped, tag = 'input window, operand 3, single buffered']
    #allocation10 [shape = 's32[1]{0}', space=sflag, size = 0x4, scoped, tag = 'scoped memory for tpu_custom_call.1']
    #allocation11 [shape = 'u8[4096]{0}', space=vmem, size = 0x1000, scoped, tag = 'input window, operand 4, single buffered']
    #allocation12 [shape = 'u8[8192]{0}', space=vmem, size = 0x2000, scoped, tag = 'input window, operand 5, single buffered']
    #allocation13 [shape = 's32[1]{0}', space=sflag, size = 0x4, scoped, tag = 'scoped memory for tpu_custom_call.1']
    #allocation14 [shape = 'u8[8192]{0}', space=vmem, size = 0x2000, scoped, tag = 'input window, operand 6, single buffered']
    #allocation15 [shape = 'u8[8192]{0}', space=vmem, size = 0x2000, scoped, tag = 'input window, operand 7, single buffered']
    #allocation16 [shape = 's32[1]{0}', space=sflag, size = 0x4, scoped, tag = 'scoped memory for tpu_custom_call.1']
    #allocation17 [shape = 'u8[512]{0}', space=vmem, size = 0x400, scoped, tag = 'input window, operand 8, single buffered']
    #allocation18 [shape = 'u8[512]{0}', space=vmem, size = 0x400, scoped, tag = 'input window, operand 9, single buffered']
    #allocation19 [shape = 's32[1]{0}', space=sflag, size = 0x4, scoped, tag = 'scoped memory for tpu_custom_call.1']
    #allocation20 [shape = 'u8[512]{0}', space=vmem, size = 0x400, scoped, tag = 'input window, operand 10, single buffered']
    #allocation21 [shape = 'u8[512]{0}', space=vmem, size = 0x400, scoped, tag = 'input window, operand 11, single buffered']
    #allocation22 [shape = 's32[1]{0}', space=sflag, size = 0x4, scoped, tag = 'scoped memory for tpu_custom_call.1']
    #allocation23 [shape = 'u8[512]{0}', space=vmem, size = 0x400, scoped, tag = 'input window, operand 12, single buffered']
    #allocation24 [shape = 'u8[512]{0}', space=vmem, size = 0x400, scoped, tag = 'input window, operand 13, single buffered']
    #allocation25 [shape = 's32[1]{0}', space=sflag, size = 0x4, scoped, tag = 'scoped memory for tpu_custom_call.1']
    #allocation26 [shape = 'u8[512]{0}', space=vmem, size = 0x400, scoped, tag = 'input window, operand 14, single buffered']
    #allocation27 [shape = 'u8[65536]{0}', space=vmem, size = 0x10000, scoped, tag = 'input window, operand 16, single buffered']
    #allocation28 [shape = 's32[1]{0}', space=sflag, size = 0x4, scoped, tag = 'scoped memory for tpu_custom_call.1']
    #allocation29 [shape = 'u8[4096]{0}', space=vmem, size = 0x1000, scoped, tag = 'output window, operand 0, single buffered']
    #allocation30 [shape = 'u8[4096]{0}', space=vmem, size = 0x1000, scoped, tag = 'output window, operand 1, single buffered']
    #allocation31 [shape = 's32[1]{0}', space=sflag, size = 0x4, scoped, tag = 'scoped memory for tpu_custom_call.1']
    %29 = vsyncpa [#allocation4], 0
    %30 = vsyncpa [#allocation7], 0
    %31 = vsyncpa [#allocation10], 0
    %32 = vsyncpa [#allocation13], 0
    %33 = vsyncpa [#allocation16], 0
    %34 = vsyncpa [#allocation19], 0
    %35 = vsyncpa [#allocation22], 0
    %36 = vsyncpa [#allocation25], 0
    %37 = vsyncpa [#allocation28], 0
    %38 = vsyncpa [#allocation5], 0
    %39 = vsyncpa [#allocation31], 0
    // Predicated region
    $region2: #{tpu_custom_call.1} parent=1 // pred_check
      _
    $region3: #{tpu_custom_call.1} parent=1 // pred_check_branch
      %41 = sbr.rel (0) target = $region5
    $region4: #{tpu_custom_call.1} parent=1 // pred_region
      %43 = vsyncadd [#allocation4], 0
      %s45 = sshll.u32 %s0, 4
      %s46 = int_to_ptr.hbm [resolvable:$true] %s45
      %s47 = sshll.u32 [#allocation3], 4
      %s48 = int_to_ptr.vmem [resolvable:$true] %s47
      %50 = dma.hbm_to_vmem [thread:$0]  %s46, 128, %s48, [#allocation4]
    $region5: #{tpu_custom_call.1} parent=1 // pred_fallthru
      _
    // Predicated region
    $region6: #{tpu_custom_call.1} parent=1 // pred_check
      _
    $region7: #{tpu_custom_call.1} parent=1 // pred_check_branch
      %52 = sbr.rel (0) target = $region9
    $region8: #{tpu_custom_call.1} parent=1 // pred_region
      %54 = vsyncadd [#allocation7], 0
      %s56 = sshll.u32 %s1, 4
      %s57 = int_to_ptr.hbm [resolvable:$true] %s56
      %s58 = sshll.u32 [#allocation6], 4
      %s59 = int_to_ptr.vmem [resolvable:$true] %s58
      %61 = dma.hbm_to_vmem [thread:$0]  %s57, 128, %s59, [#allocation7]
    $region9: #{tpu_custom_call.1} parent=1 // pred_fallthru
      _
    // Predicated region
    $region10: #{tpu_custom_call.1} parent=1 // pred_check
      _
    $region11: #{tpu_custom_call.1} parent=1 // pred_check_branch
      %63 = sbr.rel (0) target = $region13
    $region12: #{tpu_custom_call.1} parent=1 // pred_region
      %65 = vsyncadd [#allocation7], 0
      %s67 = sshll.u32 %s2, 4
      %s68 = int_to_ptr.hbm [resolvable:$true] %s67
      %s69 = sshll.u32 [#allocation8], 4
      %s70 = int_to_ptr.vmem [resolvable:$true] %s69
      %72 = dma.hbm_to_vmem [thread:$0]  %s68, 128, %s70, [#allocation7]
    $region13: #{tpu_custom_call.1} parent=1 // pred_fallthru
      _
    // Predicated region
    $region14: #{tpu_custom_call.1} parent=1 // pred_check
      _
    $region15: #{tpu_custom_call.1} parent=1 // pred_check_branch
      %74 = sbr.rel (0) target = $region17
    $region16: #{tpu_custom_call.1} parent=1 // pred_region
      %76 = vsyncadd [#allocation10], 0
      %s78 = sshll.u32 %s3, 4
      %s79 = int_to_ptr.hbm [resolvable:$true] %s78
      %s80 = sshll.u32 [#allocation9], 4
      %s81 = int_to_ptr.vmem [resolvable:$true] %s80
      %83 = dma.hbm_to_vmem [thread:$0]  %s79, 128, %s81, [#allocation10]
    $region17: #{tpu_custom_call.1} parent=1 // pred_fallthru
      _
    // Predicated region
    $region18: #{tpu_custom_call.1} parent=1 // pred_check
      _
    $region19: #{tpu_custom_call.1} parent=1 // pred_check_branch
      %85 = sbr.rel (0) target = $region21
    $region20: #{tpu_custom_call.1} parent=1 // pred_region
      %87 = vsyncadd [#allocation10], 0
      %s89 = sshll.u32 %s4, 4
      %s90 = int_to_ptr.hbm [resolvable:$true] %s89
      %s91 = sshll.u32 [#allocation11], 4
      %s92 = int_to_ptr.vmem [resolvable:$true] %s91
      %94 = dma.hbm_to_vmem [thread:$0]  %s90, 128, %s92, [#allocation10]
    $region21: #{tpu_custom_call.1} parent=1 // pred_fallthru
      _
    // Predicated region
    $region22: #{tpu_custom_call.1} parent=1 // pred_check
      _
    $region23: #{tpu_custom_call.1} parent=1 // pred_check_branch
      %96 = sbr.rel (0) target = $region25
    $region24: #{tpu_custom_call.1} parent=1 // pred_region
      %98 = vsyncadd [#allocation13], 0
      %s99 = sshll.u32 %s5, 4
      %s100 = int_to_ptr.hbm [resolvable:$true] %s99
      %s101 = sshll.u32 [#allocation12], 4
      %s102 = int_to_ptr.vmem [resolvable:$true] %s101
      %107 = dma.hbm_to_vmem [thread:$0]  %s100, 256, %s102, [#allocation13], 128, 128, 8
    $region25: #{tpu_custom_call.1} parent=1 // pred_fallthru
      _
    // Predicated region
    $region26: #{tpu_custom_call.1} parent=1 // pred_check
      _
    $region27: #{tpu_custom_call.1} parent=1 // pred_check_branch
      %109 = sbr.rel (0) target = $region29
    $region28: #{tpu_custom_call.1} parent=1 // pred_region
      %111 = vsyncadd [#allocation13], 0
      %s112 = sshll.u32 %s6, 4
      %s113 = int_to_ptr.hbm [resolvable:$true] %s112
      %s114 = sshll.u32 [#allocation14], 4
      %s115 = int_to_ptr.vmem [resolvable:$true] %s114
      %120 = dma.hbm_to_vmem [thread:$0]  %s113, 256, %s115, [#allocation13], 128, 128, 8
    $region29: #{tpu_custom_call.1} parent=1 // pred_fallthru
      _
    // Predicated region
    $region30: #{tpu_custom_call.1} parent=1 // pred_check
      _
    $region31: #{tpu_custom_call.1} parent=1 // pred_check_branch
      %122 = sbr.rel (0) target = $region33
    $region32: #{tpu_custom_call.1} parent=1 // pred_region
      %124 = vsyncadd [#allocation16], 0
      %s125 = sshll.u32 %s7, 4
      %s126 = int_to_ptr.hbm [resolvable:$true] %s125
      %s127 = sshll.u32 [#allocation15], 4
      %s128 = int_to_ptr.vmem [resolvable:$true] %s127
      %133 = dma.hbm_to_vmem [thread:$0]  %s126, 256, %s128, [#allocation16], 128, 128, 8
    $region33: #{tpu_custom_call.1} parent=1 // pred_fallthru
      _
    // Predicated region
    $region34: #{tpu_custom_call.1} parent=1 // pred_check
      _
    $region35: #{tpu_custom_call.1} parent=1 // pred_check_branch
      %135 = sbr.rel (0) target = $region37
    $region36: #{tpu_custom_call.1} parent=1 // pred_region
      %137 = vsyncadd [#allocation16], 0
      %s139 = sshll.u32 %s8, 4
      %s140 = int_to_ptr.hbm [resolvable:$true] %s139
      %s141 = sshll.u32 [#allocation17], 4
      %s142 = int_to_ptr.vmem [resolvable:$true] %s141
      %144 = dma.hbm_to_vmem [thread:$0]  %s140, 16, %s142, [#allocation16]
    $region37: #{tpu_custom_call.1} parent=1 // pred_fallthru
      _
    // Predicated region
    $region38: #{tpu_custom_call.1} parent=1 // pred_check
      _
    $region39: #{tpu_custom_call.1} parent=1 // pred_check_branch
      %146 = sbr.rel (0) target = $region41
    $region40: #{tpu_custom_call.1} parent=1 // pred_region
      %148 = vsyncadd [#allocation19], 0
      %s150 = sshll.u32 %s9, 4
      %s151 = int_to_ptr.hbm [resolvable:$true] %s150
      %s152 = sshll.u32 [#allocation18], 4
      %s153 = int_to_ptr.vmem [resolvable:$true] %s152
      %155 = dma.hbm_to_vmem [thread:$0]  %s151, 16, %s153, [#allocation19]
    $region41: #{tpu_custom_call.1} parent=1 // pred_fallthru
      _
    // Predicated region
    $region42: #{tpu_custom_call.1} parent=1 // pred_check
      _
    $region43: #{tpu_custom_call.1} parent=1 // pred_check_branch
      %157 = sbr.rel (0) target = $region45
    $region44: #{tpu_custom_call.1} parent=1 // pred_region
      %159 = vsyncadd [#allocation19], 0
      %s161 = sshll.u32 %s10, 4
      %s162 = int_to_ptr.hbm [resolvable:$true] %s161
      %s163 = sshll.u32 [#allocation20], 4
      %s164 = int_to_ptr.vmem [resolvable:$true] %s163
      %166 = dma.hbm_to_vmem [thread:$0]  %s162, 16, %s164, [#allocation19]
    $region45: #{tpu_custom_call.1} parent=1 // pred_fallthru
      _
    // Predicated region
    $region46: #{tpu_custom_call.1} parent=1 // pred_check
      _
    $region47: #{tpu_custom_call.1} parent=1 // pred_check_branch
      %168 = sbr.rel (0) target = $region49
    $region48: #{tpu_custom_call.1} parent=1 // pred_region
      %170 = vsyncadd [#allocation22], 0
      %s172 = sshll.u32 %s11, 4
      %s173 = int_to_ptr.hbm [resolvable:$true] %s172
      %s174 = sshll.u32 [#allocation21], 4
      %s175 = int_to_ptr.vmem [resolvable:$true] %s174
      %177 = dma.hbm_to_vmem [thread:$0]  %s173, 16, %s175, [#allocation22]
    $region49: #{tpu_custom_call.1} parent=1 // pred_fallthru
      _
    // Predicated region
    $region50: #{tpu_custom_call.1} parent=1 // pred_check
      _
    $region51: #{tpu_custom_call.1} parent=1 // pred_check_branch
      %179 = sbr.rel (0) target = $region53
    $region52: #{tpu_custom_call.1} parent=1 // pred_region
      %181 = vsyncadd [#allocation22], 0
      %s183 = sshll.u32 %s12, 4
      %s184 = int_to_ptr.hbm [resolvable:$true] %s183
      %s185 = sshll.u32 [#allocation23], 4
      %s186 = int_to_ptr.vmem [resolvable:$true] %s185
      %188 = dma.hbm_to_vmem [thread:$0]  %s184, 16, %s186, [#allocation22]
    $region53: #{tpu_custom_call.1} parent=1 // pred_fallthru
      _
    // Predicated region
    $region54: #{tpu_custom_call.1} parent=1 // pred_check
      _
    $region55: #{tpu_custom_call.1} parent=1 // pred_check_branch
      %190 = sbr.rel (0) target = $region57
    $region56: #{tpu_custom_call.1} parent=1 // pred_region
      %192 = vsyncadd [#allocation25], 0
      %s194 = sshll.u32 %s13, 4
      %s195 = int_to_ptr.hbm [resolvable:$true] %s194
      %s196 = sshll.u32 [#allocation24], 4
      %s197 = int_to_ptr.vmem [resolvable:$true] %s196
      %199 = dma.hbm_to_vmem [thread:$0]  %s195, 16, %s197, [#allocation25]
    $region57: #{tpu_custom_call.1} parent=1 // pred_fallthru
      _
    // Predicated region
    $region58: #{tpu_custom_call.1} parent=1 // pred_check
      _
    $region59: #{tpu_custom_call.1} parent=1 // pred_check_branch
      %201 = sbr.rel (0) target = $region61
    $region60: #{tpu_custom_call.1} parent=1 // pred_region
      %203 = vsyncadd [#allocation25], 0
      %s205 = sshll.u32 %s14, 4
      %s206 = int_to_ptr.hbm [resolvable:$true] %s205
      %s207 = sshll.u32 [#allocation26], 4
      %s208 = int_to_ptr.vmem [resolvable:$true] %s207
      %210 = dma.hbm_to_vmem [thread:$0]  %s206, 16, %s208, [#allocation25]
    $region61: #{tpu_custom_call.1} parent=1 // pred_fallthru
      _
    // Predicated region
    $region62: #{tpu_custom_call.1} parent=1 // pred_check
      _
    $region63: #{tpu_custom_call.1} parent=1 // pred_check_branch
      %212 = sbr.rel (0) target = $region65
    $region64: #{tpu_custom_call.1} parent=1 // pred_region
      _
    $region65: #{tpu_custom_call.1} parent=1 // pred_fallthru
      _
    // Predicated region
    $region66: #{tpu_custom_call.1} parent=1 // pred_check
      _
    $region67: #{tpu_custom_call.1} parent=1 // pred_check_branch
      %214 = sbr.rel (0) target = $region69
    $region68: #{tpu_custom_call.1} parent=1 // pred_region
      %216 = vsyncadd [#allocation28], 0
      %s217 = sshll.u32 %s16, 4
      %s218 = int_to_ptr.hbm [resolvable:$true] %s217
      %s219 = sshll.u32 [#allocation27], 4
      %s220 = int_to_ptr.vmem [resolvable:$true] %s219
      %225 = dma.hbm_to_vmem [thread:$0]  %s218, 2048, %s220, [#allocation28], 128, 128, 8
    $region69: #{tpu_custom_call.1} parent=1 // pred_fallthru
      _
    // Predicated region
    $region70: #{tpu_custom_call.1} parent=1 // pred_check
      _
    $region71: #{tpu_custom_call.1} parent=1 // pred_check_branch
      %227 = sbr.rel (0) target = $region73
    $region72: #{tpu_custom_call.1} parent=1 // pred_region
      _
    $region73: #{tpu_custom_call.1} parent=1 // pred_fallthru
      _
    // Predicated region
    $region74: #{tpu_custom_call.1} parent=1 // pred_check
      _
    $region75: #{tpu_custom_call.1} parent=1 // pred_check_branch
      %229 = sbr.rel (0) target = $region77
    $region76: #{tpu_custom_call.1} parent=1 // pred_region
      _
    $region77: #{tpu_custom_call.1} parent=1 // pred_fallthru
      _
    // Predicated region
    $region78: #{tpu_custom_call.1} parent=1 // pred_check
      _
    $region79: #{tpu_custom_call.1} parent=1 // pred_check_branch
      %231 = sbr.rel (0) target = $region81
    $region80: #{tpu_custom_call.1} parent=1 // pred_region
      _
    $region81: #{tpu_custom_call.1} parent=1 // pred_fallthru
      _
    // Predicated region
    $region82: #{tpu_custom_call.1} parent=1 // pred_check
      _
    $region83: #{tpu_custom_call.1} parent=1 // pred_check_branch
      %233 = sbr.rel (0) target = $region85
    $region84: #{tpu_custom_call.1} parent=1 // pred_region
      %235 = dma.done [#allocation4], 128
    $region85: #{tpu_custom_call.1} parent=1 // pred_fallthru
      _
    // Predicated region
    $region86: #{tpu_custom_call.1} parent=1 // pred_check
      _
    $region87: #{tpu_custom_call.1} parent=1 // pred_check_branch
      %237 = sbr.rel (0) target = $region89
    $region88: #{tpu_custom_call.1} parent=1 // pred_region
      %239 = dma.done [#allocation7], 128
    $region89: #{tpu_custom_call.1} parent=1 // pred_fallthru
      _
    // Predicated region
    $region90: #{tpu_custom_call.1} parent=1 // pred_check
      _
    $region91: #{tpu_custom_call.1} parent=1 // pred_check_branch
      %241 = sbr.rel (0) target = $region93
    $region92: #{tpu_custom_call.1} parent=1 // pred_region
      %243 = dma.done [#allocation7], 128
    $region93: #{tpu_custom_call.1} parent=1 // pred_fallthru
      _
    // Predicated region
    $region94: #{tpu_custom_call.1} parent=1 // pred_check
      _
    $region95: #{tpu_custom_call.1} parent=1 // pred_check_branch
      %245 = sbr.rel (0) target = $region97
    $region96: #{tpu_custom_call.1} parent=1 // pred_region
      %247 = dma.done [#allocation10], 128
    $region97: #{tpu_custom_call.1} parent=1 // pred_fallthru
      _
    // Predicated region
    $region98: #{tpu_custom_call.1} parent=1 // pred_check
      _
    $region99: #{tpu_custom_call.1} parent=1 // pred_check_branch
      %249 = sbr.rel (0) target = $region101
    $region100: #{tpu_custom_call.1} parent=1 // pred_region
      %251 = dma.done [#allocation10], 128
    $region101: #{tpu_custom_call.1} parent=1 // pred_fallthru
      _
    // Predicated region
    $region102: #{tpu_custom_call.1} parent=1 // pred_check
      _
    $region103: #{tpu_custom_call.1} parent=1 // pred_check_branch
      %253 = sbr.rel (0) target = $region105
    $region104: #{tpu_custom_call.1} parent=1 // pred_region
      %255 = dma.done [#allocation13], 256
    $region105: #{tpu_custom_call.1} parent=1 // pred_fallthru
      _
    // Predicated region
    $region106: #{tpu_custom_call.1} parent=1 // pred_check
      _
    $region107: #{tpu_custom_call.1} parent=1 // pred_check_branch
      %257 = sbr.rel (0) target = $region109
    $region108: #{tpu_custom_call.1} parent=1 // pred_region
      %259 = dma.done [#allocation13], 256
    $region109: #{tpu_custom_call.1} parent=1 // pred_fallthru
      _
    // Predicated region
    $region110: #{tpu_custom_call.1} parent=1 // pred_check
      _
    $region111: #{tpu_custom_call.1} parent=1 // pred_check_branch
      %261 = sbr.rel (0) target = $region113
    $region112: #{tpu_custom_call.1} parent=1 // pred_region
      %263 = dma.done [#allocation16], 256
    $region113: #{tpu_custom_call.1} parent=1 // pred_fallthru
      _
    // Predicated region
    $region114: #{tpu_custom_call.1} parent=1 // pred_check
      _
    $region115: #{tpu_custom_call.1} parent=1 // pred_check_branch
      %265 = sbr.rel (0) target = $region117
    $region116: #{tpu_custom_call.1} parent=1 // pred_region
      %267 = dma.done [#allocation16], 16
    $region117: #{tpu_custom_call.1} parent=1 // pred_fallthru
      _
    // Predicated region
    $region118: #{tpu_custom_call.1} parent=1 // pred_check
      _
    $region119: #{tpu_custom_call.1} parent=1 // pred_check_branch
      %269 = sbr.rel (0) target = $region121
    $region120: #{tpu_custom_call.1} parent=1 // pred_region
      %271 = dma.done [#allocation19], 16
    $region121: #{tpu_custom_call.1} parent=1 // pred_fallthru
      _
    // Predicated region
    $region122: #{tpu_custom_call.1} parent=1 // pred_check
      _
    $region123: #{tpu_custom_call.1} parent=1 // pred_check_branch
      %273 = sbr.rel (0) target = $region125
    $region124: #{tpu_custom_call.1} parent=1 // pred_region
      %275 = dma.done [#allocation19], 16
    $region125: #{tpu_custom_call.1} parent=1 // pred_fallthru
      _
    // Predicated region
    $region126: #{tpu_custom_call.1} parent=1 // pred_check
      _
    $region127: #{tpu_custom_call.1} parent=1 // pred_check_branch
      %277 = sbr.rel (0) target = $region129
    $region128: #{tpu_custom_call.1} parent=1 // pred_region
      %279 = dma.done [#allocation22], 16
    $region129: #{tpu_custom_call.1} parent=1 // pred_fallthru
      _
    // Predicated region
    $region130: #{tpu_custom_call.1} parent=1 // pred_check
      _
    $region131: #{tpu_custom_call.1} parent=1 // pred_check_branch
      %281 = sbr.rel (0) target = $region133
    $region132: #{tpu_custom_call.1} parent=1 // pred_region
      %283 = dma.done [#allocation22], 16
    $region133: #{tpu_custom_call.1} parent=1 // pred_fallthru
      _
    // Predicated region
    $region134: #{tpu_custom_call.1} parent=1 // pred_check
      _
    $region135: #{tpu_custom_call.1} parent=1 // pred_check_branch
      %285 = sbr.rel (0) target = $region137
    $region136: #{tpu_custom_call.1} parent=1 // pred_region
      %287 = dma.done [#allocation25], 16
    $region137: #{tpu_custom_call.1} parent=1 // pred_fallthru
      _
    // Predicated region
    $region138: #{tpu_custom_call.1} parent=1 // pred_check
      _
    $region139: #{tpu_custom_call.1} parent=1 // pred_check_branch
      %289 = sbr.rel (0) target = $region141
    $region140: #{tpu_custom_call.1} parent=1 // pred_region
      %291 = dma.done [#allocation25], 16
    $region141: #{tpu_custom_call.1} parent=1 // pred_fallthru
      _
    // Predicated region
    $region142: #{tpu_custom_call.1} parent=1 // pred_check
      _
    $region143: #{tpu_custom_call.1} parent=1 // pred_check_branch
      %293 = sbr.rel (0) target = $region145
    $region144: #{tpu_custom_call.1} parent=1 // pred_region
      %295 = dma.done [#allocation28], 2048
    $region145: #{tpu_custom_call.1} parent=1 // pred_fallthru
      _
    %v296 = vld [vmem:[#allocation17] sm:$0x1]
    %v298 = vperm.slane %v296, 0
    %v300 = vadd.f32 %v298, 0.0
    %v301 = vld [vmem:[#allocation3] sm:$0xff]
    %v302 = vld [vmem:[#allocation12] sm:$0xff]
    %v303 = vld [vmem:[#allocation12 + $0x8] sm:$0xff]
    %vm304 = vcmask 130048
    %v306 = vsel %vm304, %v301, 0
    %308 = vmatpush.msra.mxu0 0.0
    %309 = vmatpush.msra.mxu0 0.0
    %310 = vmatpush.msra.mxu0 0.0
    %311 = vmatpush.msra.mxu0 0.0
    %312 = vmatpush.msra.mxu0 0.0
    %313 = vmatpush.msra.mxu0 0.0
    %314 = vmatpush.msra.mxu0 0.0
    %315 = vmatpush.msra.mxu0 0.0
    %316 = vmatpush.msra.mxu0 0.0
    %317 = vmatpush.msra.mxu0 0.0
    %318 = vmatpush.msra.mxu0 0.0
    %319 = vmatpush.msra.mxu0 0.0
    %320 = vmatpush.msra.mxu0 0.0
    %321 = vmatpush.msra.mxu0 0.0
    %322 = vmatpush.msra.mxu0 %v303
    %323 = vmatpush.msra.mxu0 %v302
    %324 = vmatmul.f32.gmra.mxu0 %v306
    %v325 = vpop.f32.mrf.mxu0
    %v326 = vadd.f32 0.0, %v325
    %327 = vdwg.mxu0
    %v328 = vadd.f32 %v300, %v326
    %v329 = vld [vmem:[#allocation6] sm:$0xff]
    %v330 = vld [vmem:[#allocation14] sm:$0xff]
    %v331 = vld [vmem:[#allocation14 + $0x8] sm:$0xff]
    %v333 = vsel %vm304, %v329, 0
    %335 = vmatpush.msra.mxu0 0.0
    %336 = vmatpush.msra.mxu0 0.0
    %337 = vmatpush.msra.mxu0 0.0
    %338 = vmatpush.msra.mxu0 0.0
    %339 = vmatpush.msra.mxu0 0.0
    %340 = vmatpush.msra.mxu0 0.0
    %341 = vmatpush.msra.mxu0 0.0
    %342 = vmatpush.msra.mxu0 0.0
    %343 = vmatpush.msra.mxu0 0.0
    %344 = vmatpush.msra.mxu0 0.0
    %345 = vmatpush.msra.mxu0 0.0
    %346 = vmatpush.msra.mxu0 0.0
    %347 = vmatpush.msra.mxu0 0.0
    %348 = vmatpush.msra.mxu0 0.0
    %349 = vmatpush.msra.mxu0 %v331
    %350 = vmatpush.msra.mxu0 %v330
    %351 = vmatmul.f32.gmra.mxu0 %v333
    %v352 = vpop.f32.mrf.mxu0
    %v353 = vadd.f32 0.0, %v352
    %354 = vdwg.mxu0
    %v355 = vadd.f32 %v328, %v353
    %v356 = vld [vmem:[#allocation8] sm:$0xff]
    %v357 = vld [vmem:[#allocation15] sm:$0xff]
    %v358 = vld [vmem:[#allocation15 + $0x8] sm:$0xff]
    %v360 = vsel %vm304, %v356, 0
    %362 = vmatpush.msra.mxu0 0.0
    %363 = vmatpush.msra.mxu0 0.0
    %364 = vmatpush.msra.mxu0 0.0
    %365 = vmatpush.msra.mxu0 0.0
    %366 = vmatpush.msra.mxu0 0.0
    %367 = vmatpush.msra.mxu0 0.0
    %368 = vmatpush.msra.mxu0 0.0
    %369 = vmatpush.msra.mxu0 0.0
    %370 = vmatpush.msra.mxu0 0.0
    %371 = vmatpush.msra.mxu0 0.0
    %372 = vmatpush.msra.mxu0 0.0
    %373 = vmatpush.msra.mxu0 0.0
    %374 = vmatpush.msra.mxu0 0.0
    %375 = vmatpush.msra.mxu0 0.0
    %376 = vmatpush.msra.mxu0 %v358
    %377 = vmatpush.msra.mxu0 %v357
    %378 = vmatmul.f32.gmra.mxu0 %v360
    %v379 = vpop.f32.mrf.mxu0
    %v380 = vadd.f32 0.0, %v379
    %381 = vdwg.mxu0
    %v382 = vadd.f32 %v355, %v380
    %383 = vst [vmem:[#allocation30] sm:$0xff] %v382
    %v384 = vld [vmem:[#allocation2] sm:$0x1]
    %v385 = vld [vmem:[%s19] sm:$0x1]
    %v386 = vld [vmem:[#allocation18] sm:$0x1]
    %v387 = vld [vmem:[#allocation20] sm:$0x1]
    %v388 = vrot.slane %v382, 4
    %v389 = vadd.f32 %v382, %v388
    %v390 = vrot.slane %v389, 2
    %v391 = vadd.f32 %v389, %v390
    %v392 = vrot.slane %v391, 1
    %v393 = vadd.f32 %v391, %v392
    %v394 = vrcp.pop 8.0
    %v395 = vmul.f32 8.0, %v394
    %v396 = vsub.f32 1.0, %v395
    %v397 = vmul.f32 %v394, %v396
    %v398 = vadd.f32 %v394, %v397
    %vm399 = vweird.f32 %v394
    %v400 = vsel %vm399, %v394, %v398
    %v401 = vmul.f32 %v393, %v400
    %v402 = vmul.f32 %v382, %v382
    %v403 = vrot.slane %v402, 4
    %v404 = vadd.f32 %v402, %v403
    %v405 = vrot.slane %v404, 2
    %v406 = vadd.f32 %v404, %v405
    %v407 = vrot.slane %v406, 1
    %v408 = vadd.f32 %v406, %v407
    %v409 = vmul.f32 %v408, %v400
    %v410 = vmul.f32 %v401, %v401
    %v411 = vsub.f32 %v409, %v410
    %v412 = vsub.f32 %v382, %v401
    %v413 = vadd.f32 %v411, 1e-05
    %v414 = vrsqrt.pop %v413
    %v415 = vmul.f32 %v414, %v413
    %v416 = vmul.f32 %v415, %v414
    %v417 = vmul.f32 0.5, %v416
    %v418 = vsub.f32 1.5, %v417
    %v419 = vmul.f32 %v414, %v418
    %vm420 = vweird.f32 %v413
    %vm421 = vweird.f32 %v414
    %vm422 = vmor %vm420, %vm421
    %v423 = vsel %vm422, %v414, %v419
    %v424 = vmul.f32 %v412, %v423
    %v426 = vperm.slane %v386, 0
    %v428 = vmul.f32 %v424, %v426
    %v430 = vperm.slane %v387, 0
    %v432 = vadd.f32 %v428, %v430
    %vm433 = vcmp.ge.f32.partialorder %v432, 0.0
    %v435 = vperm.slane %v384, 0
    %436 = vset.pattern.permute.xlu0 0
    %437 = vperm.xlu0 %436, %v435
    %v438 = vpop.permute.xlu0 %437
    %v440 = vmul.f32 %v438, %v432
    %v441 = vsel %vm433, %v432, %v440
    %v442 = vld [vmem:[#allocation27] sm:$0xff]
    %v443 = vld [vmem:[#allocation27 + $0x8] sm:$0xff]
    %v444 = vld [vmem:[#allocation27 + $0x10] sm:$0xff]
    %v445 = vld [vmem:[#allocation27 + $0x18] sm:$0xff]
    %v446 = vld [vmem:[#allocation27 + $0x20] sm:$0xff]
    %v447 = vld [vmem:[#allocation27 + $0x28] sm:$0xff]
    %v448 = vld [vmem:[#allocation27 + $0x30] sm:$0xff]
    %v449 = vld [vmem:[#allocation27 + $0x38] sm:$0xff]
    %v450 = vld [vmem:[#allocation27 + $0x40] sm:$0xff]
    %v451 = vld [vmem:[#allocation27 + $0x48] sm:$0xff]
    %v452 = vld [vmem:[#allocation27 + $0x50] sm:$0xff]
    %v453 = vld [vmem:[#allocation27 + $0x58] sm:$0xff]
    %v454 = vld [vmem:[#allocation27 + $0x60] sm:$0xff]
    %v455 = vld [vmem:[#allocation27 + $0x68] sm:$0xff]
    %v456 = vld [vmem:[#allocation27 + $0x70] sm:$0xff]
    %v457 = vld [vmem:[#allocation27 + $0x78] sm:$0xff]
    %458 = vmatpush.msra.mxu0 %v457
    %459 = vmatpush.msra.mxu0 %v456
    %460 = vmatpush.msra.mxu0 %v455
    %461 = vmatpush.msra.mxu0 %v454
    %462 = vmatpush.msra.mxu0 %v453
    %463 = vmatpush.msra.mxu0 %v452
    %464 = vmatpush.msra.mxu0 %v451
    %465 = vmatpush.msra.mxu0 %v450
    %466 = vmatpush.msra.mxu0 %v449
    %467 = vmatpush.msra.mxu0 %v448
    %468 = vmatpush.msra.mxu0 %v447
    %469 = vmatpush.msra.mxu0 %v446
    %470 = vmatpush.msra.mxu0 %v445
    %471 = vmatpush.msra.mxu0 %v444
    %472 = vmatpush.msra.mxu0 %v443
    %473 = vmatpush.msra.mxu0 %v442
    %474 = vmatmul.f32.gmra.mxu0 %v441
    %v475 = vpop.f32.mrf.mxu0
    %v476 = vadd.f32 0.0, %v475
    %477 = vdwg.mxu0
    %v479 = vperm.slane %v385, 0
    %v481 = vadd.f32 %v479, %v476
    %v482 = vld [vmem:[#allocation9] sm:$0xff]
    %v483 = vld [vmem:[#allocation21] sm:$0x1]
    %v484 = vld [vmem:[#allocation23] sm:$0x1]
    %vm485 = vcmask 64512
    %v486 = vsel %vm485, %v482, 0.0
    %v487 = vrot.slane %v486, 4
    %v488 = vadd.f32 %v486, %v487
    %v489 = vrot.slane %v488, 2
    %v490 = vadd.f32 %v488, %v489
    %v491 = vrot.slane %v490, 1
    %v492 = vadd.f32 %v490, %v491
    %v493 = vmul.f32 %v492, %v400
    %v494 = vmul.f32 %v482, %v482
    %v495 = vsel %vm485, %v494, 0.0
    %v496 = vrot.slane %v495, 4
    %v497 = vadd.f32 %v495, %v496
    %v498 = vrot.slane %v497, 2
    %v499 = vadd.f32 %v497, %v498
    %v500 = vrot.slane %v499, 1
    %v501 = vadd.f32 %v499, %v500
    %v502 = vmul.f32 %v501, %v400
    %v503 = vmul.f32 %v493, %v493
    %v504 = vsub.f32 %v502, %v503
    %v505 = vsub.f32 %v482, %v493
    %v506 = vadd.f32 %v504, 1e-05
    %v507 = vrsqrt.pop %v506
    %v508 = vmul.f32 %v507, %v506
    %v509 = vmul.f32 %v508, %v507
    %v510 = vmul.f32 0.5, %v509
    %v511 = vsub.f32 1.5, %v510
    %v512 = vmul.f32 %v507, %v511
    %vm513 = vweird.f32 %v506
    %vm514 = vweird.f32 %v507
    %vm515 = vmor %vm513, %vm514
    %v516 = vsel %vm515, %v507, %v512
    %v517 = vmul.f32 %v505, %v516
    %v519 = vperm.slane %v483, 0
    %v521 = vmul.f32 %v517, %v519
    %v523 = vperm.slane %v484, 0
    %v525 = vadd.f32 %v521, %v523
    %vm526 = vcmp.ge.f32.partialorder %v525, 0.0
    %v527 = vmul.f32 %v438, %v525
    %v528 = vsel %vm526, %v525, %v527
    %v529 = vld [vmem:[%s17] sm:$0xff]
    %v531 = vsel %vm485, %v528, 0
    %533 = vmatpush.msra.mxu0 0.0
    %534 = vmatpush.msra.mxu0 0.0
    %535 = vmatpush.msra.mxu0 0.0
    %536 = vmatpush.msra.mxu0 0.0
    %537 = vmatpush.msra.mxu0 0.0
    %538 = vmatpush.msra.mxu0 0.0
    %539 = vmatpush.msra.mxu0 0.0
    %540 = vmatpush.msra.mxu0 0.0
    %541 = vmatpush.msra.mxu0 0.0
    %542 = vmatpush.msra.mxu0 0.0
    %543 = vmatpush.msra.mxu0 0.0
    %544 = vmatpush.msra.mxu0 0.0
    %545 = vmatpush.msra.mxu0 0.0
    %546 = vmatpush.msra.mxu0 0.0
    %547 = vmatpush.msra.mxu0 0.0
    %548 = vmatpush.msra.mxu0 %v529
    %549 = vmatmul.f32.gmra.mxu0 %v531
    %v550 = vpop.f32.mrf.mxu0
    %v551 = vadd.f32 0.0, %v550
    %552 = vdwg.mxu0
    %v553 = vadd.f32 %v481, %v551
    %v554 = vld [vmem:[#allocation11] sm:$0xff]
    %v555 = vld [vmem:[#allocation24] sm:$0x1]
    %v556 = vld [vmem:[#allocation26] sm:$0x1]
    %v557 = vsel %vm485, %v554, 0.0
    %v558 = vrot.slane %v557, 4
    %v559 = vadd.f32 %v557, %v558
    %v560 = vrot.slane %v559, 2
    %v561 = vadd.f32 %v559, %v560
    %v562 = vrot.slane %v561, 1
    %v563 = vadd.f32 %v561, %v562
    %v564 = vmul.f32 %v563, %v400
    %v565 = vmul.f32 %v554, %v554
    %v566 = vsel %vm485, %v565, 0.0
    %v567 = vrot.slane %v566, 4
    %v568 = vadd.f32 %v566, %v567
    %v569 = vrot.slane %v568, 2
    %v570 = vadd.f32 %v568, %v569
    %v571 = vrot.slane %v570, 1
    %v572 = vadd.f32 %v570, %v571
    %v573 = vmul.f32 %v572, %v400
    %v574 = vmul.f32 %v564, %v564
    %v575 = vsub.f32 %v573, %v574
    %v576 = vsub.f32 %v554, %v564
    %v577 = vadd.f32 %v575, 1e-05
    %v578 = vrsqrt.pop %v577
    %v579 = vmul.f32 %v578, %v577
    %v580 = vmul.f32 %v579, %v578
    %v581 = vmul.f32 0.5, %v580
    %v582 = vsub.f32 1.5, %v581
    %v583 = vmul.f32 %v578, %v582
    %vm584 = vweird.f32 %v577
    %vm585 = vweird.f32 %v578
    %vm586 = vmor %vm584, %vm585
    %v587 = vsel %vm586, %v578, %v583
    %v588 = vmul.f32 %v576, %v587
    %v590 = vperm.slane %v555, 0
    %v592 = vmul.f32 %v588, %v590
    %v594 = vperm.slane %v556, 0
    %v596 = vadd.f32 %v592, %v594
    %vm597 = vcmp.ge.f32.partialorder %v596, 0.0
    %v598 = vmul.f32 %v438, %v596
    %v599 = vsel %vm597, %v596, %v598
    %v600 = vld [vmem:[%s18] sm:$0xff]
    %v602 = vsel %vm485, %v599, 0
    %604 = vmatpush.msra.mxu0 0.0
    %605 = vmatpush.msra.mxu0 0.0
    %606 = vmatpush.msra.mxu0 0.0
    %607 = vmatpush.msra.mxu0 0.0
    %608 = vmatpush.msra.mxu0 0.0
    %609 = vmatpush.msra.mxu0 0.0
    %610 = vmatpush.msra.mxu0 0.0
    %611 = vmatpush.msra.mxu0 0.0
    %612 = vmatpush.msra.mxu0 0.0
    %613 = vmatpush.msra.mxu0 0.0
    %614 = vmatpush.msra.mxu0 0.0
    %615 = vmatpush.msra.mxu0 0.0
    %616 = vmatpush.msra.mxu0 0.0
    %617 = vmatpush.msra.mxu0 0.0
    %618 = vmatpush.msra.mxu0 0.0
    %619 = vmatpush.msra.mxu0 %v600
    %620 = vmatmul.f32.gmra.mxu0 %v602
    %v621 = vpop.f32.mrf.mxu0
    %v622 = vadd.f32 0.0, %v621
    %623 = vdwg.mxu0
    %v624 = vadd.f32 %v553, %v622
    %625 = vst [vmem:[#allocation29] sm:$0xff] %v624
    // Predicated region
    $region146: #{tpu_custom_call.1} parent=1 // pred_check
      _
    $region147: #{tpu_custom_call.1} parent=1 // pred_check_branch
      %627 = sbr.rel (0) target = $region149
    $region148: #{tpu_custom_call.1} parent=1 // pred_region
      %629 = vsyncadd [#allocation5], 0
      %s631 = sshll.u32 [#allocation29], 4
      %s632 = int_to_ptr.vmem [resolvable:$true] %s631
      %s633 = sshll.u32 %s20, 4
      %s634 = int_to_ptr.hbm [resolvable:$true] %s633
      %636 = dma.vmem_to_hbm [thread:$0]  %s632, 128, %s634, [#allocation5]
    $region149: #{tpu_custom_call.1} parent=1 // pred_fallthru
      _
    // Predicated region
    $region150: #{tpu_custom_call.1} parent=1 // pred_check
      _
    $region151: #{tpu_custom_call.1} parent=1 // pred_check_branch
      %638 = sbr.rel (0) target = $region153
    $region152: #{tpu_custom_call.1} parent=1 // pred_region
      %640 = vsyncadd [#allocation31], 0
      %s642 = sshll.u32 [#allocation30], 4
      %s643 = int_to_ptr.vmem [resolvable:$true] %s642
      %s644 = sshll.u32 %s21, 4
      %s645 = int_to_ptr.hbm [resolvable:$true] %s644
      %647 = dma.vmem_to_hbm [thread:$0]  %s643, 128, %s645, [#allocation31]
    $region153: #{tpu_custom_call.1} parent=1 // pred_fallthru
      _
    // Predicated region
    $region154: #{tpu_custom_call.1} parent=1 // pred_check
      _
    $region155: #{tpu_custom_call.1} parent=1 // pred_check_branch
      %649 = sbr.rel (0) target = $region157
    $region156: #{tpu_custom_call.1} parent=1 // pred_region
      %651 = dma.done [#allocation5], 128
    $region157: #{tpu_custom_call.1} parent=1 // pred_fallthru
      _
    // Predicated region
    $region158: #{tpu_custom_call.1} parent=1 // pred_check
      _
    $region159: #{tpu_custom_call.1} parent=1 // pred_check_branch
      %653 = sbr.rel (0) target = $region161
    $region160: #{tpu_custom_call.1} parent=1 // pred_region
      %655 = dma.done [#allocation31], 128
    $region161: #{tpu_custom_call.1} parent=1 // pred_fallthru
      _
    %656 = vsyncpa [#allocation4], 1
    %657 = vsyncpa [#allocation7], 1
    %658 = vsyncpa [#allocation10], 1
    %659 = vsyncpa [#allocation13], 1
    %660 = vsyncpa [#allocation16], 1
    %661 = vsyncpa [#allocation19], 1
    %662 = vsyncpa [#allocation22], 1
    %663 = vsyncpa [#allocation25], 1
    %664 = vsyncpa [#allocation28], 1
    %665 = vsyncpa [#allocation5], 1
    %666 = vsyncpa [#allocation31], 1

</llo_original>
